<compile_context>
chip_gen: v7x
topology: tpu7x:2x2x1
jax: 0.10.0
libtpu: 0.0.40
codegen_flags: <defaults>
</compile_context>

<pallas_src>
import math

import jax
import jax.numpy as jnp
from jax.experimental import pallas as pl
from jax.experimental.pallas import tpu as pltpu


# ---------------------------------------------------------------------------
# Kernels
# ---------------------------------------------------------------------------

def _ocr_ptr_kernel_3d(q_in_ref, k_in_ref, bias_ref,
                       wq_ref, bq_ref, wk_ref, bk_ref, out_ref):
    """3-D query path. Blocks: q (bB,Tq,H), k (bB,Tk,H), bias (bB,1,Tk)."""
    bB, Tq, H = q_in_ref.shape
    _, Tk, _ = k_in_ref.shape
    QK = wq_ref.shape[1]

    # Tq is padded to a multiple of 8 and QK/Tk to multiples of 128 in the
    # wrapper, so these reshapes are layout-preserving (no XLU relayout).
    q_rows = q_in_ref[...].reshape(bB * Tq, H)
    k_rows = k_in_ref[...].reshape(bB * Tk, H)

    # Flattened projections: one large-M bf16 MXU matmul each, f32 accumulate.
    q = jnp.dot(q_rows, wq_ref[...], preferred_element_type=jnp.float32) + bq_ref[...]
    k = jnp.dot(k_rows, wk_ref[...], preferred_element_type=jnp.float32) + bk_ref[...]

    q = q.reshape(bB, Tq, QK).astype(jnp.bfloat16)
    k = k.reshape(bB, Tk, QK).astype(jnp.bfloat16)

    # Batched score matmul, contraction over QK expressed directly (no k.T).
    # 1/sqrt(QK) is folded into wq/bq; mask bias precomputed in the wrapper.
    scores = jnp.einsum("bqd,bkd->bqk", q, k,
                        preferred_element_type=jnp.float32)
    out_ref[...] = (scores + bias_ref[...]).astype(out_ref.dtype)


def _ocr_ptr_kernel_2d(q_in_ref, k_in_ref, bias_ref,
                       wq_ref, bq_ref, wk_ref, bk_ref, out_ref):
    """2-D (squeeze) query path. Batch maps to sublanes, Tk (128-padded) to lanes.

    The per-batch 1-row MXU score matmul would be <1% MXU utilization, so the
    score contraction is a VPU multiply + lane reduce; projections stay on MXU.
    """
    bB, H = q_in_ref.shape
    _, Tk, _ = k_in_ref.shape
    QK = wq_ref.shape[1]

    q = jnp.dot(q_in_ref[...], wq_ref[...],
                preferred_element_type=jnp.float32) + bq_ref[...]      # (bB, QK) f32

    k_rows = k_in_ref[...].reshape(bB * Tk, H)
    k = jnp.dot(k_rows, wk_ref[...],
                preferred_element_type=jnp.float32) + bk_ref[...]
    k = k.reshape(bB, Tk, QK)                                          # f32

    scores = jnp.sum(q[:, None, :] * k, axis=-1)                       # (bB, Tk) f32
    out_ref[...] = (scores + bias_ref[...]).astype(out_ref.dtype)


# ---------------------------------------------------------------------------
# Blocking / capacity helpers
# ---------------------------------------------------------------------------

def _round_up(x, m):
    return ((x + m - 1) // m) * m


def _const_block_spec(shape):
    """BlockSpec for a grid-invariant operand (weights/bias): single-buffered."""
    zero_idx = tuple(0 for _ in shape)
    try:
        return pl.BlockSpec(shape, lambda b: zero_idx,
                            pipeline_mode=pl.Buffered(1))
    except (TypeError, AttributeError):  # fall back if pipeline_mode unsupported
        return pl.BlockSpec(shape, lambda b: zero_idx)


def _tpu_vmem_capacity_bytes():
    try:
        return int(pltpu.get_tpu_info().vmem_capacity_bytes)
    except Exception:
        return 64 * 1024 * 1024  # conservative: v7x per-TensorCore VMEM


def _row_target():
    kind = ""
    try:
        kind = jax.devices()[0].device_kind.lower()
    except Exception:
        pass
    if "v5" in kind:
        return 128   # v5e: 4x128 MXU, lowest HBM BW; small tiles already saturate
    if "v6" in kind:
        return 512   # v6e: 128 MiB VMEM; big tiles amortize per-step overhead
    return 256       # v7x / unknown: 64 MiB VMEM per TC, stay moderate


def _kernel_vmem_bytes(bB, Tq, Tk, H, QK, is_2d, out_itemsize):
    """Conservative VMEM estimate for one grid step (all terms, x1.25 fudge)."""
    q_rows = bB if is_2d else bB * Tq
    k_rows = bB * Tk
    n_scores = bB * Tk if is_2d else bB * Tq * Tk
    # HBM<->VMEM pipelined blocks (double-buffered by BlockSpec):
    pipelined = (q_rows * H * 2            # bf16 query block
                 + k_rows * H * 2          # bf16 key block
                 + bB * Tk * 4             # f32 mask-bias block
                 + n_scores * out_itemsize)  # output block
    # Grid-invariant weight / bias blocks (single-buffered):
    consts = 2 * H * QK * 2 + 2 * QK * 4
    # In-step intermediates: f32 projections + bf16 copies + f32 scores.
    inter = (q_rows + k_rows) * QK * (4 + 2) + n_scores * 4
    if is_2d:
        inter += bB * Tk * QK * 4          # broadcast q*k product before reduce
    return int(1.25 * (2 * pipelined + consts + inter))


def _choose_batch_block(B, Tq, Tk, H, QK, is_2d, out_itemsize,
                        row_target, budget_bytes):
    """Largest divisor of B fitting the VMEM budget, stopping at row_target.

    Always keeps >= 2 grid steps (v7x has 2 TensorCores and only shards the
    "parallel" axis across them when there are >= 2 steps), preferring an even
    step count when it costs at most a 2x smaller block.
    """
    max_bB = B if B < 2 else B // 2
    best = 1
    for bB in range(1, max_bB + 1):
        if B % bB:
            continue
        if _kernel_vmem_bytes(bB, Tq, Tk, H, QK, is_2d, out_itemsize) > budget_bytes:
            break
        best = bB
        q_rows = bB if is_2d else bB * Tq
        if q_rows >= row_target:
            break
    if B >= 2 and (B // best) % 2 == 1:
        for d in range(best, 0, -1):
            if B % d == 0 and (B // d) % 2 == 0 and 2 * d >= best:
                best = d
                break
    return best


# ---------------------------------------------------------------------------
# Forward wrapper
# ---------------------------------------------------------------------------

def ocr_ptr_net_forward(query_inputs, key_inputs, attention_mask, params,
                        out_dtype=jnp.float32):
    """Pallas implementation of OcrPtrNet.forward.

    out_dtype=jnp.bfloat16 halves score writeback traffic (useful on v5e) if
    the downstream consumer tolerates it; default keeps the torch f32 output.
    """
    wq_t, bq, wk_t, bk = params["wq_t"], params["bq"], params["wk_t"], params["bk"]
    H, QK = wq_t.shape

    squeeze_result = query_inputs.ndim == 2
    assert attention_mask.ndim == 2

    B = query_inputs.shape[0]
    Tq = 1 if squeeze_result else query_inputs.shape[1]
    Tk = key_inputs.shape[1]

    # ---- fold 1/sqrt(QK) into the query projection; pad QK to a lane tile ----
    scale = 1.0 / math.sqrt(QK)
    QKp = _round_up(QK, 128)
    pad_qk = QKp - QK
    wq_s = jnp.pad((wq_t * scale).astype(jnp.bfloat16), ((0, 0), (0, pad_qk)))
    wk_b = jnp.pad(wk_t.astype(jnp.bfloat16), ((0, 0), (0, pad_qk)))
    bq_s = jnp.pad((bq * scale).astype(jnp.float32), (0, pad_qk)).reshape(1, QKp)
    bk_2 = jnp.pad(bk.astype(jnp.float32), (0, pad_qk)).reshape(1, QKp)

    # ---- pad Tk to a multiple of 128: lane-dense score stores + full MXU N ----
    Tkp = _round_up(Tk, 128)
    k_bf = key_inputs.astype(jnp.bfloat16)
    mask_f = attention_mask.astype(jnp.float32)
    if Tkp != Tk:
        k_bf = jnp.pad(k_bf, ((0, 0), (0, Tkp - Tk), (0, 0)))
        mask_f = jnp.pad(mask_f, ((0, 0), (0, Tkp - Tk)))  # padded cols -> mask 0 -> -1e4
    mask_bias_2d = (1.0 - mask_f) * -10000.0               # (B, Tkp) f32

    out_itemsize = jnp.dtype(out_dtype).itemsize
    cap = _tpu_vmem_capacity_bytes()
    vmem_limit = int(min(cap * 3 // 4, 100 * 1024 * 1024))   # ~48 MiB on v7x, ~96 MiB v5e/v6e
    budget = vmem_limit - 8 * 1024 * 1024                    # headroom for compiler scratch
    row_target = _row_target()

    compiler_params = pltpu.CompilerParams(
        dimension_semantics=("parallel",),
        vmem_limit_bytes=vmem_limit)

    if squeeze_result:
        # ---- 2-D query (squeeze) path: dense (bB, Tkp) output blocks ----
        q_bf = query_inputs.astype(jnp.bfloat16)             # (B, H)
        bB = _choose_batch_block(B, 1, Tkp, H, QKp, True, out_itemsize,
                                 row_target, budget)
        grid = (B // bB,)
        scores = pl.pallas_call(
            _ocr_ptr_kernel_2d,
            out_shape=jax.ShapeDtypeStruct((B, Tkp), out_dtype),
            grid_spec=pltpu.PrefetchScalarGridSpec(
                num_scalar_prefetch=0,
                grid=grid,
                in_specs=[
                    pl.BlockSpec((bB, H), lambda b: (b, 0)),        # query_inputs
                    pl.BlockSpec((bB, Tkp, H), lambda b: (b, 0, 0)),  # key_inputs
                    pl.BlockSpec((bB, Tkp), lambda b: (b, 0)),      # mask bias
                    _const_block_spec((H, QKp)),                    # Wq^T * scale
                    _const_block_spec((1, QKp)),                    # bq * scale
                    _const_block_spec((H, QKp)),                    # Wk^T
                    _const_block_spec((1, QKp)),                    # bk
                ],
                out_specs=pl.BlockSpec((bB, Tkp), lambda b: (b, 0)),
            ),
            compiler_params=compiler_params,
        )(q_bf, k_bf, mask_bias_2d, wq_s, bq_s, wk_b, bk_2)
        return scores[:, :Tk]

    # ---- 3-D query path: pad Tq to the 8-sublane granule ----
    Tqp = _round_up(Tq, 8)
    q_bf = query_inputs.astype(jnp.bfloat16)
    if Tqp != Tq:
        q_bf = jnp.pad(q_bf, ((0, 0), (0, Tqp - Tq), (0, 0)))
    mask_bias = mask_bias_2d[:, None, :]                     # (B, 1, Tkp)

    bB = _choose_batch_block(B, Tqp, Tkp, H, QKp, False, out_itemsize,
                             row_target, budget)
    grid = (B // bB,)
    # TODO(synk): for long OCR sequences (large Tq*Tk) add a 128-aligned Tk grid
    # axis marked "arbitrary" with the projected q block cached in VMEM scratch.
    scores = pl.pallas_call(
        _ocr_ptr_kernel_3d,
        out_shape=jax.ShapeDtypeStruct((B, Tqp, Tkp), out_dtype),
        grid_spec=pltpu.PrefetchScalarGridSpec(
            num_scalar_prefetch=0,
            grid=grid,
            in_specs=[
                pl.BlockSpec((bB, Tqp, H), lambda b: (b, 0, 0)),   # query_inputs
                pl.BlockSpec((bB, Tkp, H), lambda b: (b, 0, 0)),   # key_inputs
                pl.BlockSpec((bB, 1, Tkp), lambda b: (b, 0, 0)),   # mask bias
                _const_block_spec((H, QKp)),                       # Wq^T * scale
                _const_block_spec((1, QKp)),                       # bq * scale
                _const_block_spec((H, QKp)),                       # Wk^T
                _const_block_spec((1, QKp)),                       # bk
            ],
            out_specs=pl.BlockSpec((bB, Tqp, Tkp), lambda b: (b, 0, 0)),
        ),
        compiler_params=compiler_params,
    )(q_bf, k_bf, mask_bias, wq_s, bq_s, wk_b, bk_2)
    return scores[:, :Tq, :Tk]


# ---------------------------------------------------------------------------
# Parameters / reference / demo
# ---------------------------------------------------------------------------

def init_params(key, hidden_size, query_key_size=None):
    if query_key_size is None:
        query_key_size = hidden_size
    k1, k2, k3, k4 = jax.random.split(key, 4)
    bound = 1.0 / math.sqrt(hidden_size)
    # nn.Linear stores weight as (out, in); we pre-transpose to (in, out).
    wq = jax.random.uniform(k1, (query_key_size, hidden_size), jnp.float32, -bound, bound)
    bq = jax.random.uniform(k2, (query_key_size,), jnp.float32, -bound, bound)
    wk = jax.random.uniform(k3, (query_key_size, hidden_size), jnp.float32, -bound, bound)
    bk = jax.random.uniform(k4, (query_key_size,), jnp.float32, -bound, bound)
    return {"wq_t": wq.T, "bq": bq, "wk_t": wk.T, "bk": bk}


def _reference(query_inputs, key_inputs, attention_mask, params):
    # Pure-JAX f32 reference of the torch forward pass.
    ext = ((1.0 - attention_mask) * -10000.0)[:, None, :]
    q = query_inputs
    squeeze = False
    if q.ndim == 2:
        q = q[:, None, :]
        squeeze = True
    qk = params["wq_t"].shape[1]
    ql = q @ params["wq_t"] + params["bq"]
    kl = key_inputs @ params["wk_t"] + params["bk"]
    scores = jnp.einsum("bqd,bkd->bqk", ql, kl) / math.sqrt(qk)
    scores = scores + ext
    if squeeze:
        scores = scores[:, 0, :]
    return scores


if __name__ == "__main__":
    B, Tq, Tk, H = 2, 8, 16, 32
    key = jax.random.PRNGKey(0)
    kp, kq, kk, km = jax.random.split(key, 4)

    params = init_params(kp, hidden_size=H)

    query_inputs = jax.random.normal(kq, (B, Tq, H), jnp.float32)
    key_inputs = jax.random.normal(kk, (B, Tk, H), jnp.float32)
    attention_mask = (jax.random.uniform(km, (B, Tk)) > 0.3).astype(jnp.float32)

    # 3D query path.
    out = ocr_ptr_net_forward(query_inputs, key_inputs, attention_mask, params)
    out = jax.block_until_ready(out)
    ref = _reference(query_inputs, key_inputs, attention_mask, params)
    assert out.shape == (B, Tq, Tk)
    # bf16 MXU operands (f32 accumulation) -> slightly looser tolerance vs f32 ref.
    assert jnp.allclose(out, ref, atol=2e-2, rtol=2e-2), float(jnp.max(jnp.abs(out - ref)))

    # 2D query path (squeeze_result branch).
    out2 = ocr_ptr_net_forward(query_inputs[:, 0, :], key_inputs, attention_mask, params)
    out2 = jax.block_until_ready(out2)
    ref2 = _reference(query_inputs[:, 0, :], key_inputs, attention_mask, params)
    assert out2.shape == (B, Tk)
    assert jnp.allclose(out2, ref2, atol=2e-2, rtol=2e-2), float(jnp.max(jnp.abs(out2 - ref2)))

    print("KERNEL_OK")
</pallas_src>

<mosaic_0001>
module attributes {stable_mosaic.version = 11 : i64} {
  func.func @_ocr_ptr_kernel_3d(%arg0: i32, %arg1: memref<1x8x32xbf16, #tpu.memory_space<vmem>>, %arg2: memref<1x128x32xbf16, #tpu.memory_space<vmem>>, %arg3: memref<1x1x128xf32, #tpu.memory_space<vmem>>, %arg4: memref<32x128xbf16, #tpu.memory_space<vmem>>, %arg5: memref<1x128xf32, #tpu.memory_space<vmem>>, %arg6: memref<32x128xbf16, #tpu.memory_space<vmem>>, %arg7: memref<1x128xf32, #tpu.memory_space<vmem>>, %arg8: memref<1x8x128xf32, #tpu.memory_space<vmem>>) attributes {dimension_semantics = [#tpu.dimension_semantics<parallel>], iteration_bounds = array<i64: 2>, scalar_prefetch = 0 : i64, scratch_operands = 0 : i64, tpu.core_type = #tpu.core_type<tc>, window_params = [{transform_indices = @transform_0, window_bounds = array<i64: 1, 8, 32>}, {transform_indices = @transform_1, window_bounds = array<i64: 1, 128, 32>}, {transform_indices = @transform_2, window_bounds = array<i64: 1, 1, 128>}, {pipeline_mode = #tpu.pipeline_mode<synchronous>, transform_indices = @transform_3, window_bounds = array<i64: 32, 128>}, {pipeline_mode = #tpu.pipeline_mode<synchronous>, transform_indices = @transform_4, window_bounds = array<i64: 1, 128>}, {pipeline_mode = #tpu.pipeline_mode<synchronous>, transform_indices = @transform_5, window_bounds = array<i64: 32, 128>}, {pipeline_mode = #tpu.pipeline_mode<synchronous>, transform_indices = @transform_6, window_bounds = array<i64: 1, 128>}, {transform_indices = @transform_7, window_bounds = array<i64: 1, 8, 128>}]} {
    %c0 = arith.constant 0 : index
    %c0_0 = arith.constant 0 : index
    %c0_1 = arith.constant 0 : index
    %0 = vector.load %arg1[%c0, %c0_0, %c0_1] : memref<1x8x32xbf16, #tpu.memory_space<vmem>>, vector<1x8x32xbf16>
    %1 = vector.shape_cast %0 : vector<1x8x32xbf16> to vector<8x32xbf16>
    %c0_2 = arith.constant 0 : index
    %c0_3 = arith.constant 0 : index
    %c0_4 = arith.constant 0 : index
    %2 = vector.load %arg2[%c0_2, %c0_3, %c0_4] : memref<1x128x32xbf16, #tpu.memory_space<vmem>>, vector<1x128x32xbf16>
    %3 = vector.shape_cast %2 : vector<1x128x32xbf16> to vector<128x32xbf16>
    %c0_5 = arith.constant 0 : index
    %c0_6 = arith.constant 0 : index
    %4 = vector.load %arg4[%c0_5, %c0_6] : memref<32x128xbf16, #tpu.memory_space<vmem>>, vector<32x128xbf16>
    %cst = arith.constant dense<0.000000e+00> : vector<8x128xf32>
    %5 = tpu.matmul %1, %4, %cst {dimension_numbers = #tpu.dot_dimension_numbers<[1], [0], [0], [1], [0, 0, 1, 1], [], []>} : vector<8x32xbf16>, vector<32x128xbf16>, vector<8x128xf32> -> vector<8x128xf32>
    %c0_7 = arith.constant 0 : index
    %c0_8 = arith.constant 0 : index
    %6 = vector.load %arg5[%c0_7, %c0_8] : memref<1x128xf32, #tpu.memory_space<vmem>>, vector<1x128xf32>
    %7 = vector.broadcast %6 : vector<1x128xf32> to vector<8x128xf32>
    %8 = arith.addf %5, %7 : vector<8x128xf32>
    %c0_9 = arith.constant 0 : index
    %c0_10 = arith.constant 0 : index
    %9 = vector.load %arg6[%c0_9, %c0_10] : memref<32x128xbf16, #tpu.memory_space<vmem>>, vector<32x128xbf16>
    %cst_11 = arith.constant dense<0.000000e+00> : vector<128x128xf32>
    %10 = tpu.matmul %3, %9, %cst_11 {dimension_numbers = #tpu.dot_dimension_numbers<[1], [0], [0], [1], [0, 0, 1, 1], [], []>} : vector<128x32xbf16>, vector<32x128xbf16>, vector<128x128xf32> -> vector<128x128xf32>
    %c0_12 = arith.constant 0 : index
    %c0_13 = arith.constant 0 : index
    %11 = vector.load %arg7[%c0_12, %c0_13] : memref<1x128xf32, #tpu.memory_space<vmem>>, vector<1x128xf32>
    %12 = vector.broadcast %11 : vector<1x128xf32> to vector<128x128xf32>
    %13 = arith.addf %10, %12 : vector<128x128xf32>
    %14 = vector.shape_cast %8 : vector<8x128xf32> to vector<1x8x128xf32>
    %15 = arith.truncf %14 : vector<1x8x128xf32> to vector<1x8x128xbf16>
    %16 = vector.shape_cast %13 : vector<128x128xf32> to vector<1x128x128xf32>
    %17 = arith.truncf %16 : vector<1x128x128xf32> to vector<1x128x128xbf16>
    "tpu.trace_start"() <{level = 10 : i32, message = "bqd,bkd->bqk"}> : () -> ()
    %cst_14 = arith.constant dense<0.000000e+00> : vector<1x8x128xf32>
    %18 = tpu.matmul %15, %17, %cst_14 {dimension_numbers = #tpu.dot_dimension_numbers<[2], [2], [1], [1], [0, 0, 0, 1, 1, 1], [0], [0]>} : vector<1x8x128xbf16>, vector<1x128x128xbf16>, vector<1x8x128xf32> -> vector<1x8x128xf32>
    "tpu.trace_stop"() : () -> ()
    %c0_15 = arith.constant 0 : index
    %c0_16 = arith.constant 0 : index
    %c0_17 = arith.constant 0 : index
    %19 = vector.load %arg3[%c0_15, %c0_16, %c0_17] : memref<1x1x128xf32, #tpu.memory_space<vmem>>, vector<1x1x128xf32>
    %20 = vector.broadcast %19 : vector<1x1x128xf32> to vector<1x8x128xf32>
    %21 = arith.addf %18, %20 : vector<1x8x128xf32>
    %c0_18 = arith.constant 0 : index
    %c0_19 = arith.constant 0 : index
    %c0_20 = arith.constant 0 : index
    %22 = vector.load %arg8[%c0_18, %c0_19, %c0_20] : memref<1x8x128xf32, #tpu.memory_space<vmem>>, vector<1x8x128xf32>
    tpu.vector_store %arg8[%c0_18, %c0_19, %c0_20], %21 {strides = array<i32>} : memref<1x8x128xf32, #tpu.memory_space<vmem>>, vector<1x8x128xf32>,
    return
  }
  func.func @transform_0(%arg0: i32) -> (i32, i32, i32) {
    %c0_i32 = arith.constant 0 : i32
    %c0_i32_0 = arith.constant 0 : i32
    %c0_i32_1 = arith.constant 0 : i32
    return %arg0, %c0_i32, %c0_i32_0 : i32, i32, i32
  }
  func.func @transform_1(%arg0: i32) -> (i32, i32, i32) {
    %c0_i32 = arith.constant 0 : i32
    %c0_i32_0 = arith.constant 0 : i32
    %c0_i32_1 = arith.constant 0 : i32
    return %arg0, %c0_i32, %c0_i32_0 : i32, i32, i32
  }
  func.func @transform_2(%arg0: i32) -> (i32, i32, i32) {
    %c0_i32 = arith.constant 0 : i32
    %c0_i32_0 = arith.constant 0 : i32
    %c0_i32_1 = arith.constant 0 : i32
    return %arg0, %c0_i32, %c0_i32_0 : i32, i32, i32
  }
  func.func @transform_3(%arg0: i32) -> (i32, i32) {
    %c0_i32 = arith.constant 0 : i32
    %c0_i32_0 = arith.constant 0 : i32
    %c0_i32_1 = arith.constant 0 : i32
    return %c0_i32, %c0_i32_0 : i32, i32
  }
  func.func @transform_4(%arg0: i32) -> (i32, i32) {
    %c0_i32 = arith.constant 0 : i32
    %c0_i32_0 = arith.constant 0 : i32
    %c0_i32_1 = arith.constant 0 : i32
    return %c0_i32, %c0_i32_0 : i32, i32
  }
  func.func @transform_5(%arg0: i32) -> (i32, i32) {
    %c0_i32 = arith.constant 0 : i32
    %c0_i32_0 = arith.constant 0 : i32
    %c0_i32_1 = arith.constant 0 : i32
    return %c0_i32, %c0_i32_0 : i32, i32
  }
  func.func @transform_6(%arg0: i32) -> (i32, i32) {
    %c0_i32 = arith.constant 0 : i32
    %c0_i32_0 = arith.constant 0 : i32
    %c0_i32_1 = arith.constant 0 : i32
    return %c0_i32, %c0_i32_0 : i32, i32
  }
  func.func @transform_7(%arg0: i32) -> (i32, i32, i32) {
    %c0_i32 = arith.constant 0 : i32
    %c0_i32_0 = arith.constant 0 : i32
    %c0_i32_1 = arith.constant 0 : i32
    return %arg0, %c0_i32, %c0_i32_0 : i32, i32, i32
  }
}

</mosaic_0001>

<llo_original>
// kernel: tpu_custom_call.1
$region0: #{tpu_custom_call.1}
  #allocation0 [shape = 'u32[]', space=smem, size = 0x4, offset = 0x4, fixed_abs, tag = 'smem constant byte address 0x4 - core index']
  #allocation1 [shape = 'u32[144,128]{1,0:T(1,128)}', space=vmem, size = 0x12000, scoped, tag = 'internal scratch']
  %s0 = inlined_call_operand.vmem [shape: bf16[2,8,32], index: 0, kind: input, shape index: {}]
  %s1 = inlined_call_operand.vmem [shape: bf16[2,128,32], index: 1, kind: input, shape index: {}]
  %s2 = inlined_call_operand.vmem [shape: f32[2,1,128], index: 2, kind: input, shape index: {}]
  %s3 = inlined_call_operand.vmem [shape: bf16[32,128], index: 3, kind: input, shape index: {}]
  %s4 = inlined_call_operand.vmem [shape: f32[1,128], index: 4, kind: input, shape index: {}]
  %s5 = inlined_call_operand.vmem [shape: bf16[32,128], index: 5, kind: input, shape index: {}]
  %s6 = inlined_call_operand.vmem [shape: f32[1,128], index: 6, kind: input, shape index: {}]
  %s7 = inlined_call_operand.hbm [shape: f32[2,8,128], index: 7, kind: output, shape index: {}]
  %s8 = sld [smem:[#allocation0]]
  $region61: #{tpu_custom_call.1} parent=0
    _
  %s10 = ssub.s32 1, %s8
  %s11 = scalar_select 0, %s10, %s8
  $region1: #{tpu_custom_call.1} parent=0
    #allocation2 [shape = 'u8[8192]{0}', space=vmem, size = 0x2000, scoped, tag = 'output window, operand 0']
    #allocation3 [shape = 's32[2]{0}', space=sflag, size = 0x8, scoped, tag = 'scoped memory for tpu_custom_call.1']
    %12 = vsyncpa [#allocation3], 0
    %s13 = scalar_lea.sflag [#allocation3], 1
    %14 = vsyncpa %s13, 0
    loop: start=0, step=1, limit=4
    $region2: #{tpu_custom_call.1} parent=1 // loop_pre_header
      _
    $region3: #{tpu_custom_call.1} parent=1 // loop_header
      %s16 = sphi 0, %s20
      %p17 = scmp.ge.s32.totalorder %s16, 4
      %s26 = sphi 0, %s28
      %s29 = sphi 0, %s26
      %s30 = sphi 0, %s29
      %s46 = sphi 0, %s30
      %s52 = sphi 0, %s54
      %s55 = sphi 0, %s52
      %s56 = sphi 0, %s55
      %s72 = sphi 0, %s56
      %s78 = sphi 0, %s80
      %s81 = sphi 0, %s78
      %s82 = sphi 0, %s81
      %s98 = sphi 0, %s82
      %s102 = sphi 0, %s102
      %s104 = sphi 0, %s102
      %s105 = sphi 0, %s104
      %s119 = sphi 0, %s105
      %s123 = sphi 0, %s123
      %s125 = sphi 0, %s123
      %s126 = sphi 0, %s125
      %s140 = sphi 0, %s126
      %s144 = sphi 0, %s144
      %s146 = sphi 0, %s144
      %s147 = sphi 0, %s146
      %s161 = sphi 0, %s147
      %s165 = sphi 0, %s165
      %s167 = sphi 0, %s165
      %s168 = sphi 0, %s167
      %s182 = sphi 0, %s168
      %s188 = sphi 0, %s190
      %s191 = sphi 0, %s188
      %s192 = sphi 0, %s191
      %s208 = sphi 0, %s192
    $region4: #{tpu_custom_call.1} parent=1 // loop_header_branch
      %19 = sbr.rel (%p17) target = $region8
    $region5: #{tpu_custom_call.1} parent=1 // loop_body
      %s21 = ssub.s32 %s16, 1
      %s22 = ssub.s32 %s16, 2
      %s23 = sadd.s32 %s16, 1
      %s24 = ssub.s32 %s16, %s23
      %p25 = scmp.eq.s32.totalorder %s24, 0
      %s27 = sadd.s32 %s26, 1
      %s28 = scalar_select %p25, %s26, %s27
      %p31 = pneg %p25
      %p32 = scmp.eq.s32.totalorder %s16, 1
      %p33 = por %p31, %p32
      %p34 = scmp.ne.s32.totalorder %s26, %s29
      %p35 = scmp.eq.s32.totalorder %s16, 0
      %p36 = por %p34, %p35
      %p37 = scmp.ne.s32.totalorder %s26, %s29
      %p38 = scmp.eq.s32.totalorder %s21, 1
      %p39 = por %p37, %p38
      %p40 = scmp.ne.s32.totalorder %s29, %s30
      %p41 = scmp.eq.s32.totalorder %s21, 0
      %p42 = por %p40, %p41
      %p43 = scmp.ne.s32.totalorder %s29, %s30
      %p44 = scmp.eq.s32.totalorder %s22, 1
      %p45 = por %p43, %p44
      %p47 = scmp.ne.s32.totalorder %s30, %s46
      %p48 = scmp.eq.s32.totalorder %s22, 0
      %p49 = por %p47, %p48
      %s50 = ssub.s32 %s16, %s23
      %p51 = scmp.eq.s32.totalorder %s50, 0
      %s53 = sadd.s32 %s52, 1
      %s54 = scalar_select %p51, %s52, %s53
      %p57 = pneg %p51
      %p58 = scmp.eq.s32.totalorder %s16, 1
      %p59 = por %p57, %p58
      %p60 = scmp.ne.s32.totalorder %s52, %s55
      %p61 = scmp.eq.s32.totalorder %s16, 0
      %p62 = por %p60, %p61
      %p63 = scmp.ne.s32.totalorder %s52, %s55
      %p64 = scmp.eq.s32.totalorder %s21, 1
      %p65 = por %p63, %p64
      %p66 = scmp.ne.s32.totalorder %s55, %s56
      %p67 = scmp.eq.s32.totalorder %s21, 0
      %p68 = por %p66, %p67
      %p69 = scmp.ne.s32.totalorder %s55, %s56
      %p70 = scmp.eq.s32.totalorder %s22, 1
      %p71 = por %p69, %p70
      %p73 = scmp.ne.s32.totalorder %s56, %s72
      %p74 = scmp.eq.s32.totalorder %s22, 0
      %p75 = por %p73, %p74
      %s76 = ssub.s32 %s16, %s23
      %p77 = scmp.eq.s32.totalorder %s76, 0
      %s79 = sadd.s32 %s78, 1
      %s80 = scalar_select %p77, %s78, %s79
      %p83 = pneg %p77
      %p84 = scmp.eq.s32.totalorder %s16, 1
      %p85 = por %p83, %p84
      %p86 = scmp.ne.s32.totalorder %s78, %s81
      %p87 = scmp.eq.s32.totalorder %s16, 0
      %p88 = por %p86, %p87
      %p89 = scmp.ne.s32.totalorder %s78, %s81
      %p90 = scmp.eq.s32.totalorder %s21, 1
      %p91 = por %p89, %p90
      %p92 = scmp.ne.s32.totalorder %s81, %s82
      %p93 = scmp.eq.s32.totalorder %s21, 0
      %p94 = por %p92, %p93
      %p95 = scmp.ne.s32.totalorder %s81, %s82
      %p96 = scmp.eq.s32.totalorder %s22, 1
      %p97 = por %p95, %p96
      %p99 = scmp.ne.s32.totalorder %s82, %s98
      %p100 = scmp.eq.s32.totalorder %s22, 0
      %p101 = por %p99, %p100
      %s103 = sadd.s32 %s102, 1
      %p106 = scmp.eq.s32.totalorder %s16, 1
      %p107 = scmp.ne.s32.totalorder %s102, %s104
      %p108 = scmp.eq.s32.totalorder %s16, 0
      %p109 = por %p107, %p108
      %p110 = scmp.ne.s32.totalorder %s102, %s104
      %p111 = scmp.eq.s32.totalorder %s21, 1
      %p112 = por %p110, %p111
      %p113 = scmp.ne.s32.totalorder %s104, %s105
      %p114 = scmp.eq.s32.totalorder %s21, 0
      %p115 = por %p113, %p114
      %p116 = scmp.ne.s32.totalorder %s104, %s105
      %p117 = scmp.eq.s32.totalorder %s22, 1
      %p118 = por %p116, %p117
      %p120 = scmp.ne.s32.totalorder %s105, %s119
      %p121 = scmp.eq.s32.totalorder %s22, 0
      %p122 = por %p120, %p121
      %s124 = sadd.s32 %s123, 1
      %p127 = scmp.eq.s32.totalorder %s16, 1
      %p128 = scmp.ne.s32.totalorder %s123, %s125
      %p129 = scmp.eq.s32.totalorder %s16, 0
      %p130 = por %p128, %p129
      %p131 = scmp.ne.s32.totalorder %s123, %s125
      %p132 = scmp.eq.s32.totalorder %s21, 1
      %p133 = por %p131, %p132
      %p134 = scmp.ne.s32.totalorder %s125, %s126
      %p135 = scmp.eq.s32.totalorder %s21, 0
      %p136 = por %p134, %p135
      %p137 = scmp.ne.s32.totalorder %s125, %s126
      %p138 = scmp.eq.s32.totalorder %s22, 1
      %p139 = por %p137, %p138
      %p141 = scmp.ne.s32.totalorder %s126, %s140
      %p142 = scmp.eq.s32.totalorder %s22, 0
      %p143 = por %p141, %p142
      %s145 = sadd.s32 %s144, 1
      %p148 = scmp.eq.s32.totalorder %s16, 1
      %p149 = scmp.ne.s32.totalorder %s144, %s146
      %p150 = scmp.eq.s32.totalorder %s16, 0
      %p151 = por %p149, %p150
      %p152 = scmp.ne.s32.totalorder %s144, %s146
      %p153 = scmp.eq.s32.totalorder %s21, 1
      %p154 = por %p152, %p153
      %p155 = scmp.ne.s32.totalorder %s146, %s147
      %p156 = scmp.eq.s32.totalorder %s21, 0
      %p157 = por %p155, %p156
      %p158 = scmp.ne.s32.totalorder %s146, %s147
      %p159 = scmp.eq.s32.totalorder %s22, 1
      %p160 = por %p158, %p159
      %p162 = scmp.ne.s32.totalorder %s147, %s161
      %p163 = scmp.eq.s32.totalorder %s22, 0
      %p164 = por %p162, %p163
      %s166 = sadd.s32 %s165, 1
      %p169 = scmp.eq.s32.totalorder %s16, 1
      %p170 = scmp.ne.s32.totalorder %s165, %s167
      %p171 = scmp.eq.s32.totalorder %s16, 0
      %p172 = por %p170, %p171
      %p173 = scmp.ne.s32.totalorder %s165, %s167
      %p174 = scmp.eq.s32.totalorder %s21, 1
      %p175 = por %p173, %p174
      %p176 = scmp.ne.s32.totalorder %s167, %s168
      %p177 = scmp.eq.s32.totalorder %s21, 0
      %p178 = por %p176, %p177
      %p179 = scmp.ne.s32.totalorder %s167, %s168
      %p180 = scmp.eq.s32.totalorder %s22, 1
      %p181 = por %p179, %p180
      %p183 = scmp.ne.s32.totalorder %s168, %s182
      %p184 = scmp.eq.s32.totalorder %s22, 0
      %p185 = por %p183, %p184
      %s186 = ssub.s32 %s16, %s23
      %p187 = scmp.eq.s32.totalorder %s186, 0
      %s189 = sadd.s32 %s188, 1
      %s190 = scalar_select %p187, %s188, %s189
      %p193 = pneg %p187
      %p194 = scmp.eq.s32.totalorder %s16, 1
      %p195 = por %p193, %p194
      %p196 = scmp.ne.s32.totalorder %s188, %s191
      %p197 = scmp.eq.s32.totalorder %s16, 0
      %p198 = por %p196, %p197
      %p199 = scmp.ne.s32.totalorder %s188, %s191
      %p200 = scmp.eq.s32.totalorder %s21, 1
      %p201 = por %p199, %p200
      %p202 = scmp.ne.s32.totalorder %s191, %s192
      %p203 = scmp.eq.s32.totalorder %s21, 0
      %p204 = por %p202, %p203
      %p205 = scmp.ne.s32.totalorder %s191, %s192
      %p206 = scmp.eq.s32.totalorder %s22, 1
      %p207 = por %p205, %p206
      %p209 = scmp.ne.s32.totalorder %s192, %s208
      %p210 = scmp.eq.s32.totalorder %s22, 0
      %p211 = por %p209, %p210
      %p212 = scmp.le.s32.totalorder 1, %s16
      %p213 = scmp.lt.s32.totalorder %s16, 3
      %p214 = pnand %p212, %p213
      %p215 = pneg %p214
      // Predicated region
      $region9: #{tpu_custom_call.1} parent=5 // pred_check
        _
      $region10: #{tpu_custom_call.1} parent=5 // pred_check_branch
        %217 = sbr.rel (%p214) target = $region12
      $region11: #{tpu_custom_call.1} parent=5 // pred_region
        %s218 = ssub.s32 %s16, 1
        // Predicated region
        $region13: #{tpu_custom_call.1} parent=11 // pred_check
          %p219 = pneg %p115
        $region14: #{tpu_custom_call.1} parent=11 // pred_check_branch
          %221 = sbr.rel (%p219) target = $region16
        $region15: #{tpu_custom_call.1} parent=11 // pred_region
          _
        $region16: #{tpu_custom_call.1} parent=11 // pred_fallthru
          _
        // Predicated region
        $region17: #{tpu_custom_call.1} parent=11 // pred_check
          %p222 = pneg %p136
        $region18: #{tpu_custom_call.1} parent=11 // pred_check_branch
          %224 = sbr.rel (%p222) target = $region20
        $region19: #{tpu_custom_call.1} parent=11 // pred_region
          _
        $region20: #{tpu_custom_call.1} parent=11 // pred_fallthru
          _
        // Predicated region
        $region21: #{tpu_custom_call.1} parent=11 // pred_check
          %p225 = pneg %p157
        $region22: #{tpu_custom_call.1} parent=11 // pred_check_branch
          %227 = sbr.rel (%p225) target = $region24
        $region23: #{tpu_custom_call.1} parent=11 // pred_region
          _
        $region24: #{tpu_custom_call.1} parent=11 // pred_fallthru
          _
        // Predicated region
        $region25: #{tpu_custom_call.1} parent=11 // pred_check
          %p228 = pneg %p178
        $region26: #{tpu_custom_call.1} parent=11 // pred_check_branch
          %230 = sbr.rel (%p228) target = $region28
        $region27: #{tpu_custom_call.1} parent=11 // pred_region
          _
        $region28: #{tpu_custom_call.1} parent=11 // pred_fallthru
          _
      $region12: #{tpu_custom_call.1} parent=5 // pred_fallthru
        _
      %p231 = scmp.lt.s32.totalorder %s16, 2
      // Predicated region
      $region29: #{tpu_custom_call.1} parent=5 // pred_check
        %p232 = pneg %p231
      $region30: #{tpu_custom_call.1} parent=5 // pred_check_branch
        %234 = sbr.rel (%p232) target = $region32
      $region31: #{tpu_custom_call.1} parent=5 // pred_region
        // Predicated region
        $region33: #{tpu_custom_call.1} parent=31 // pred_check
          %p235 = pneg %p36
        $region34: #{tpu_custom_call.1} parent=31 // pred_check_branch
          %237 = sbr.rel (%p235) target = $region36
        $region35: #{tpu_custom_call.1} parent=31 // pred_region
          %p238 = scmp.lt.s32.totalorder %s16, 1
          %s239 = scalar_select %p238, %s16, 1
          %s240 = smul.addr %s239, 4
          %s241 = scalar_lea.vmem %s0, %s240
        $region36: #{tpu_custom_call.1} parent=31 // pred_fallthru
          _
        // Predicated region
        $region37: #{tpu_custom_call.1} parent=31 // pred_check
          %p242 = pneg %p62
        $region38: #{tpu_custom_call.1} parent=31 // pred_check_branch
          %244 = sbr.rel (%p242) target = $region40
        $region39: #{tpu_custom_call.1} parent=31 // pred_region
          %p245 = scmp.lt.s32.totalorder %s16, 1
          %s246 = scalar_select %p245, %s16, 1
          %s247 = smul.addr %s246, 16
          %s248 = smul.addr %s247, 4
          %s249 = scalar_lea.vmem %s1, %s248
        $region40: #{tpu_custom_call.1} parent=31 // pred_fallthru
          _
        // Predicated region
        $region41: #{tpu_custom_call.1} parent=31 // pred_check
          %p250 = pneg %p88
        $region42: #{tpu_custom_call.1} parent=31 // pred_check_branch
          %252 = sbr.rel (%p250) target = $region44
        $region43: #{tpu_custom_call.1} parent=31 // pred_region
          %p253 = scmp.lt.s32.totalorder %s16, 1
          %s254 = scalar_select %p253, %s16, 1
          %s255 = scalar_lea.vmem %s2, %s254
        $region44: #{tpu_custom_call.1} parent=31 // pred_fallthru
          _
      $region32: #{tpu_custom_call.1} parent=5 // pred_fallthru
        _
      %p256 = scmp.le.s32.totalorder 1, %s16
      %p257 = scmp.lt.s32.totalorder %s16, 3
      %p258 = pnand %p256, %p257
      %p259 = pneg %p258
      // Predicated region
      $region45: #{tpu_custom_call.1} parent=5 // pred_check
        _
      $region46: #{tpu_custom_call.1} parent=5 // pred_check_branch
        %261 = sbr.rel (%p258) target = $region48
      $region47: #{tpu_custom_call.1} parent=5 // pred_region
        %s262 = ssub.s32 %s16, 1
        %p263 = scmp.lt.s32.totalorder %s21, 1
        %s264 = scalar_select %p263, %s21, 1
        %s265 = smul.addr %s264, 4
        %s266 = scalar_lea.vmem %s0, %s265
        %p267 = pneg %p42
        %p268 = pneg %p39
        %p269 = scmp.lt.s32.totalorder %s21, 1
        %s270 = scalar_select %p269, %s21, 1
        %s271 = smul.addr %s270, 16
        %s272 = smul.addr %s271, 4
        %s273 = scalar_lea.vmem %s1, %s272
        %p274 = pneg %p68
        %p275 = pneg %p65
        %p276 = scmp.lt.s32.totalorder %s21, 1
        %s277 = scalar_select %p276, %s21, 1
        %s278 = scalar_lea.vmem %s2, %s277
        %p279 = pneg %p94
        %p280 = pneg %p91
        %p281 = pneg %p115
        %p282 = pneg %p112
        %p283 = pneg %p136
        %p284 = pneg %p133
        %p285 = pneg %p157
        %p286 = pneg %p154
        %p287 = pneg %p178
        %p288 = pneg %p175
        %p289 = pneg %p204
        %p290 = pneg %p201
        %s291 = sand.u32 %s191, 1
        %s292 = scalar_lea.sflag [#allocation3], %s291
        %s293 = sand.u32 %s191, 1
        %s294 = smul.addr %s293, 8
        %s295 = scalar_lea.vmem [#allocation2], %s294
        %p296 = scmp.lt.s32.totalorder %s21, 1
        %s297 = scalar_select %p296, %s21, 1
        %s298 = smul.addr %s297, 4
        %s299 = scalar_lea.vmem %s0, %s298
        %p300 = scmp.lt.s32.totalorder %s21, 1
        %s301 = scalar_select %p300, %s21, 1
        %s302 = smul.addr %s301, 16
        %s303 = smul.addr %s302, 4
        %s304 = scalar_lea.vmem %s1, %s303
        %p305 = scmp.lt.s32.totalorder %s21, 1
        %s306 = scalar_select %p305, %s21, 1
        %s307 = scalar_lea.vmem %s2, %s306
        %v309 = vld [vmem:[%s299] sm:$0xf]
        %v310 = vld [vmem:[%s304] sm:$0xf]
        %v311 = vld [vmem:[%s304 + $0x4] sm:$0xf]
        %v312 = vld [vmem:[%s304 + $0x8] sm:$0xf]
        %v313 = vld [vmem:[%s304 + $0xc] sm:$0xf]
        %v314 = vld [vmem:[%s304 + $0x10] sm:$0xf]
        %v315 = vld [vmem:[%s304 + $0x14] sm:$0xf]
        %v316 = vld [vmem:[%s304 + $0x18] sm:$0xf]
        %v317 = vld [vmem:[%s304 + $0x1c] sm:$0xf]
        %v318 = vld [vmem:[%s304 + $0x20] sm:$0xf]
        %v319 = vld [vmem:[%s304 + $0x24] sm:$0xf]
        %v320 = vld [vmem:[%s304 + $0x28] sm:$0xf]
        %v321 = vld [vmem:[%s304 + $0x2c] sm:$0xf]
        %v322 = vld [vmem:[%s304 + $0x30] sm:$0xf]
        %v323 = vld [vmem:[%s304 + $0x34] sm:$0xf]
        %v324 = vld [vmem:[%s304 + $0x38] sm:$0xf]
        %v325 = vld [vmem:[%s304 + $0x3c] sm:$0xf]
        %v326 = vld [vmem:[%s3] sm:$0xf]
        %v327 = vld [vmem:[%s3 + $0x4] sm:$0xf]
        %v328 = vld [vmem:[%s3 + $0x8] sm:$0xf]
        %v329 = vld [vmem:[%s3 + $0xc] sm:$0xf]
        %v330 = vld [vmem:[%s4] sm:$0x1]
        %v332 = vlaneseq
        %v333 = vshrl.u32 %v332, 7
        %v334 = vsub.s32 0, %v333
        %v335 = vrot.slane %v330, %v334
        %v341 = vunpack.c.l.b16 %v326
        %v342 = vunpack.c.l.b16 %v327
        %v343 = vunpack.c.l.b16 %v328
        %v344 = vunpack.c.l.b16 %v329
        %v345 = vpack.c.b16 %v342, %v341
        %v346 = vpack.c.b16 %v344, %v343
        %vm349 = vcmask 261120
        %v351 = vsel %vm349, %v309, 0
        %353 = vmatprep.subr.bf16.mxu0 0
        %354 = vmatpush1.bf16.msra.mxu0 %v345
        %355 = vmatprep.subr.bf16.mxu0 0
        %356 = vmatpush1.bf16.msra.mxu0 %v346
        %357 = vmatprep.subr.bf16.mxu0 0
        %358 = vmatpush1.bf16.msra.mxu0 0
        %359 = vmatprep.subr.bf16.mxu0 0
        %360 = vmatpush1.bf16.msra.mxu0 0
        %361 = vmatprep.subr.bf16.mxu0 0
        %362 = vmatpush1.bf16.msra.mxu0 0
        %363 = vmatprep.subr.bf16.mxu0 0
        %364 = vmatpush1.bf16.msra.mxu0 0
        %365 = vmatprep.subr.bf16.mxu0 0
        %366 = vmatpush1.bf16.msra.mxu0 0
        %367 = vmatprep.subr.bf16.mxu0 0
        %368 = vmatpush1.bf16.msra.mxu0 0
        %369 = vmatprep.subr.bf16.mxu0 0
        %370 = vmatpush1.bf16.msra.mxu0 0
        %371 = vmatprep.subr.bf16.mxu0 0
        %372 = vmatpush1.bf16.msra.mxu0 0
        %373 = vmatprep.subr.bf16.mxu0 0
        %374 = vmatpush1.bf16.msra.mxu0 0
        %375 = vmatprep.subr.bf16.mxu0 0
        %376 = vmatpush1.bf16.msra.mxu0 0
        %377 = vmatprep.subr.bf16.mxu0 0
        %378 = vmatpush1.bf16.msra.mxu0 0
        %379 = vmatprep.subr.bf16.mxu0 0
        %380 = vmatpush1.bf16.msra.mxu0 0
        %381 = vmatprep.subr.bf16.mxu0 0
        %382 = vmatpush1.bf16.msra.mxu0 0
        %383 = vmatprep.subr.bf16.mxu0 0
        %384 = vmatpush1.bf16.msra.mxu0 0
        %385 = vmatprep.mubr.bf16.mxu0 0
        %386 = vmatmul.mubr.bf16.gmra.mrb[0].mxu0 %v351
        %v387 = vpop.f32.mrb[0].mxu0
        %v388 = vadd.f32 %v335, %v387
        %v389 = vpop.f32.mrb[0].mxu0
        %v390 = vpop.f32.mrb[0].mxu0
        %v391 = vpop.f32.mrb[0].mxu0
        %392 = vdwg.mxu0
        %v393 = vld [vmem:[%s5] sm:$0xf]
        %v394 = vld [vmem:[%s5 + $0x4] sm:$0xf]
        %v395 = vld [vmem:[%s5 + $0x8] sm:$0xf]
        %v396 = vld [vmem:[%s5 + $0xc] sm:$0xf]
        %v397 = vld [vmem:[%s6] sm:$0x1]
        %v399 = vlaneseq
        %v400 = vshrl.u32 %v399, 7
        %v401 = vsub.s32 0, %v400
        %v402 = vrot.slane %v397, %v401
        %v420 = vunpack.c.l.b16 %v310
        %v421 = vunpack.c.l.b16 %v311
        %v422 = vunpack.c.l.b16 %v312
        %v423 = vunpack.c.l.b16 %v313
        %v424 = vunpack.c.l.b16 %v314
        %v425 = vunpack.c.l.b16 %v315
        %v426 = vunpack.c.l.b16 %v316
        %v427 = vunpack.c.l.b16 %v317
        %v428 = vunpack.c.l.b16 %v318
        %v429 = vunpack.c.l.b16 %v319
        %v430 = vunpack.c.l.b16 %v320
        %v431 = vunpack.c.l.b16 %v321
        %v432 = vunpack.c.l.b16 %v322
        %v433 = vunpack.c.l.b16 %v323
        %v434 = vunpack.c.l.b16 %v324
        %v435 = vunpack.c.l.b16 %v325
        %v436 = vpack.c.b16 %v421, %v420
        %v437 = vpack.c.b16 %v423, %v422
        %v438 = vpack.c.b16 %v425, %v424
        %v439 = vpack.c.b16 %v427, %v426
        %v440 = vpack.c.b16 %v429, %v428
        %v441 = vpack.c.b16 %v431, %v430
        %v442 = vpack.c.b16 %v433, %v432
        %v443 = vpack.c.b16 %v435, %v434
        %v448 = vunpack.c.l.b16 %v393
        %v449 = vunpack.c.l.b16 %v394
        %v450 = vunpack.c.l.b16 %v395
        %v451 = vunpack.c.l.b16 %v396
        %v452 = vpack.c.b16 %v449, %v448
        %v453 = vpack.c.b16 %v451, %v450
        %v457 = vsel %vm349, %v436, 0
        %v460 = vsel %vm349, %v437, 0
        %v463 = vsel %vm349, %v438, 0
        %v466 = vsel %vm349, %v439, 0
        %v469 = vsel %vm349, %v440, 0
        %v472 = vsel %vm349, %v441, 0
        %v475 = vsel %vm349, %v442, 0
        %v478 = vsel %vm349, %v443, 0
        %480 = vmatprep.subr.bf16.mxu0 0
        %481 = vmatpush1.bf16.msra.mxu0 %v452
        %482 = vmatprep.subr.bf16.mxu0 0
        %483 = vmatpush1.bf16.msra.mxu0 %v453
        %484 = vmatprep.subr.bf16.mxu0 0
        %485 = vmatpush1.bf16.msra.mxu0 0
        %486 = vmatprep.subr.bf16.mxu0 0
        %487 = vmatpush1.bf16.msra.mxu0 0
        %488 = vmatprep.subr.bf16.mxu0 0
        %489 = vmatpush1.bf16.msra.mxu0 0
        %490 = vmatprep.subr.bf16.mxu0 0
        %491 = vmatpush1.bf16.msra.mxu0 0
        %492 = vmatprep.subr.bf16.mxu0 0
        %493 = vmatpush1.bf16.msra.mxu0 0
        %494 = vmatprep.subr.bf16.mxu0 0
        %495 = vmatpush1.bf16.msra.mxu0 0
        %496 = vmatprep.subr.bf16.mxu0 0
        %497 = vmatpush1.bf16.msra.mxu0 0
        %498 = vmatprep.subr.bf16.mxu0 0
        %499 = vmatpush1.bf16.msra.mxu0 0
        %500 = vmatprep.subr.bf16.mxu0 0
        %501 = vmatpush1.bf16.msra.mxu0 0
        %502 = vmatprep.subr.bf16.mxu0 0
        %503 = vmatpush1.bf16.msra.mxu0 0
        %504 = vmatprep.subr.bf16.mxu0 0
        %505 = vmatpush1.bf16.msra.mxu0 0
        %506 = vmatprep.subr.bf16.mxu0 0
        %507 = vmatpush1.bf16.msra.mxu0 0
        %508 = vmatprep.subr.bf16.mxu0 0
        %509 = vmatpush1.bf16.msra.mxu0 0
        %510 = vmatprep.subr.bf16.mxu0 0
        %511 = vmatpush1.bf16.msra.mxu0 0
        %512 = vmatprep.mubr.bf16.mxu0 0
        %513 = vmatmul.mubr.bf16.gmra.mrb[0].mxu0 %v457
        %v514 = vpop.f32.mrb[0].mxu0
        %v515 = vadd.f32 %v402, %v514
        %v516 = vpop.f32.mrb[0].mxu0
        %v517 = vpop.f32.mrb[0].mxu0
        %v518 = vadd.f32 %v402, %v517
        %v519 = vpop.f32.mrb[0].mxu0
        %520 = vmatprep.mubr.bf16.mxu0 0
        %521 = vmatmul.mubr.bf16.gmra.mrb[0].mxu0 %v460
        %v522 = vpop.f32.mrb[0].mxu0
        %v523 = vadd.f32 %v402, %v522
        %v524 = vpop.f32.mrb[0].mxu0
        %v525 = vpop.f32.mrb[0].mxu0
        %v526 = vadd.f32 %v402, %v525
        %v527 = vpop.f32.mrb[0].mxu0
        %528 = vmatprep.mubr.bf16.mxu0 0
        %529 = vmatmul.mubr.bf16.gmra.mrb[0].mxu0 %v463
        %v530 = vpop.f32.mrb[0].mxu0
        %v531 = vadd.f32 %v402, %v530
        %v532 = vpop.f32.mrb[0].mxu0
        %v533 = vpop.f32.mrb[0].mxu0
        %v534 = vadd.f32 %v402, %v533
        %v535 = vpop.f32.mrb[0].mxu0
        %536 = vmatprep.mubr.bf16.mxu0 0
        %537 = vmatmul.mubr.bf16.gmra.mrb[0].mxu0 %v466
        %v538 = vpop.f32.mrb[0].mxu0
        %v539 = vadd.f32 %v402, %v538
        %v540 = vpop.f32.mrb[0].mxu0
        %v541 = vpop.f32.mrb[0].mxu0
        %v542 = vadd.f32 %v402, %v541
        %v543 = vpop.f32.mrb[0].mxu0
        %544 = vmatprep.mubr.bf16.mxu0 0
        %545 = vmatmul.mubr.bf16.gmra.mrb[0].mxu0 %v469
        %v546 = vpop.f32.mrb[0].mxu0
        %v547 = vadd.f32 %v402, %v546
        %v548 = vpop.f32.mrb[0].mxu0
        %v549 = vpop.f32.mrb[0].mxu0
        %v550 = vadd.f32 %v402, %v549
        %v551 = vpop.f32.mrb[0].mxu0
        %552 = vmatprep.mubr.bf16.mxu0 0
        %553 = vmatmul.mubr.bf16.gmra.mrb[0].mxu0 %v472
        %v554 = vpop.f32.mrb[0].mxu0
        %v555 = vadd.f32 %v402, %v554
        %v556 = vpop.f32.mrb[0].mxu0
        %v557 = vpop.f32.mrb[0].mxu0
        %v558 = vadd.f32 %v402, %v557
        %v559 = vpop.f32.mrb[0].mxu0
        %560 = vmatprep.mubr.bf16.mxu0 0
        %561 = vmatmul.mubr.bf16.gmra.mrb[0].mxu0 %v475
        %v562 = vpop.f32.mrb[0].mxu0
        %v563 = vadd.f32 %v402, %v562
        %v564 = vpop.f32.mrb[0].mxu0
        %v565 = vpop.f32.mrb[0].mxu0
        %v566 = vadd.f32 %v402, %v565
        %v567 = vpop.f32.mrb[0].mxu0
        %568 = vmatprep.mubr.bf16.mxu0 0
        %569 = vmatmul.mubr.bf16.gmra.mrb[0].mxu0 %v478
        %v570 = vpop.f32.mrb[0].mxu0
        %v571 = vadd.f32 %v402, %v570
        %v572 = vpop.f32.mrb[0].mxu0
        %v573 = vpop.f32.mrb[0].mxu0
        %v574 = vadd.f32 %v402, %v573
        %v575 = vpop.f32.mrb[0].mxu0
        %576 = vdwg.mxu0
        %v577 = vpack.c.bf16 %v388, %v388
        %v578 = vpack.c.bf16 %v518, %v515
        %v579 = vpack.c.bf16 %v526, %v523
        %v580 = vpack.c.bf16 %v534, %v531
        %v581 = vpack.c.bf16 %v542, %v539
        %v582 = vpack.c.bf16 %v550, %v547
        %v583 = vpack.c.bf16 %v558, %v555
        %v584 = vpack.c.bf16 %v566, %v563
        %v585 = vpack.c.bf16 %v574, %v571
        %v586 = vld [vmem:[%s307] sm:$0x1]
        %v588 = vlaneseq
        %v589 = vshrl.u32 %v588, 7
        %v590 = vsub.s32 0, %v589
        %v591 = vrot.slane %v586, %v590
        %593 = vmatprep.subr.bf16.mxu0 0
        %594 = vmatpush1.bf16.xpose.msra.mxu0 %v578
        %595 = vmatprep.subr.bf16.mxu0 0
        %596 = vmatpush1.bf16.xpose.msra.mxu0 %v579
        %597 = vmatprep.subr.bf16.mxu0 0
        %598 = vmatpush1.bf16.xpose.msra.mxu0 %v580
        %599 = vmatprep.subr.bf16.mxu0 0
        %600 = vmatpush1.bf16.xpose.msra.mxu0 %v581
        %601 = vmatprep.subr.bf16.mxu0 0
        %602 = vmatpush1.bf16.xpose.msra.mxu0 %v582
        %603 = vmatprep.subr.bf16.mxu0 0
        %604 = vmatpush1.bf16.xpose.msra.mxu0 %v583
        %605 = vmatprep.subr.bf16.mxu0 0
        %606 = vmatpush1.bf16.xpose.msra.mxu0 %v584
        %607 = vmatprep.subr.bf16.mxu0 0
        %608 = vmatpush1.bf16.xpose.msra.mxu0 %v585
        %609 = vmatprep.subr.bf16.mxu0 0
        %610 = vmatpush1.bf16.xpose.msra.mxu0 0
        %611 = vmatprep.subr.bf16.mxu0 0
        %612 = vmatpush1.bf16.xpose.msra.mxu0 0
        %613 = vmatprep.subr.bf16.mxu0 0
        %614 = vmatpush1.bf16.xpose.msra.mxu0 0
        %615 = vmatprep.subr.bf16.mxu0 0
        %616 = vmatpush1.bf16.xpose.msra.mxu0 0
        %617 = vmatprep.subr.bf16.mxu0 0
        %618 = vmatpush1.bf16.xpose.msra.mxu0 0
        %619 = vmatprep.subr.bf16.mxu0 0
        %620 = vmatpush1.bf16.xpose.msra.mxu0 0
        %621 = vmatprep.subr.bf16.mxu0 0
        %622 = vmatpush1.bf16.xpose.msra.mxu0 0
        %623 = vmatprep.subr.bf16.mxu0 0
        %624 = vmatpush1.bf16.xpose.msra.mxu0 0
        %625 = vmatprep.mubr.bf16.mxu0 0
        %626 = vmatmul.mubr.bf16.gmra.mrb[0].mxu0 %v577
        %v627 = vpop.f32.mrb[0].mxu0
        %v628 = vadd.f32 %v591, %v627
        %v629 = vpop.f32.mrb[0].mxu0
        %v630 = vpop.f32.mrb[0].mxu0
        %v631 = vpop.f32.mrb[0].mxu0
        %632 = vdwg.mxu0
        %633 = vst [vmem:[%s295] sm:$0xff] %v628
        %s634 = sand.u32 %s191, 1
        %s635 = scalar_lea.sflag [#allocation3], %s634
        %s636 = sand.u32 %s191, 1
        %s637 = smul.addr %s636, 8
        %s638 = scalar_lea.vmem [#allocation2], %s637
        // Predicated region
        $region49: #{tpu_custom_call.1} parent=47 // pred_check
          %p639 = pneg %p201
        $region50: #{tpu_custom_call.1} parent=47 // pred_check_branch
          %641 = sbr.rel (%p639) target = $region52
        $region51: #{tpu_custom_call.1} parent=47 // pred_region
          %s643 = ssub.s32 128, 128
          %644 = vsyncadd %s635, %s643
          %s645 = smul.addr %s21, 128
          %s646 = scalar_lea.hbm %s7, %s645
          %s648 = sshll.u32 %s638, 4
          %s649 = int_to_ptr.vmem [resolvable:$true] %s648
          %651 = dma.vmem_to_hbm [thread:$0]  %s649, 128, %s646, %s635
        $region52: #{tpu_custom_call.1} parent=47 // pred_fallthru
          _
      $region48: #{tpu_custom_call.1} parent=5 // pred_fallthru
        _
      %p652 = scmp.le.s32.totalorder 2, %s16
      // Predicated region
      $region53: #{tpu_custom_call.1} parent=5 // pred_check
        %p653 = pneg %p652
      $region54: #{tpu_custom_call.1} parent=5 // pred_check_branch
        %655 = sbr.rel (%p653) target = $region56
      $region55: #{tpu_custom_call.1} parent=5 // pred_region
        %s656 = ssub.s32 %s16, 2
        // Predicated region
        $region57: #{tpu_custom_call.1} parent=55 // pred_check
          %p657 = pneg %p207
        $region58: #{tpu_custom_call.1} parent=55 // pred_check_branch
          %659 = sbr.rel (%p657) target = $region60
        $region59: #{tpu_custom_call.1} parent=55 // pred_region
          %s660 = sand.u32 %s192, 1
          %s661 = scalar_lea.sflag [#allocation3], %s660
          %s662 = sand.u32 %s192, 1
          %s663 = smul.addr %s662, 8
          %s664 = scalar_lea.vmem [#allocation2], %s663
          %665 = dma.done %s661, 128
        $region60: #{tpu_custom_call.1} parent=55 // pred_fallthru
          _
      $region56: #{tpu_custom_call.1} parent=5 // pred_fallthru
        _
    $region6: #{tpu_custom_call.1} parent=1 // loop_footer
      %s20 = sadd.s32 1, %s16
    $region7: #{tpu_custom_call.1} parent=1 // loop_footer_branch
      %15 = sbr.rel target = $region3
    $region8: #{tpu_custom_call.1} parent=1 // loop_exit
      _
    %666 = vsyncpa [#allocation3], 1
    %s667 = scalar_lea.sflag [#allocation3], 1
    %668 = vsyncpa %s667, 1

</llo_original>
